<compile_context>
chip_gen: v7x
topology: tpu7x:2x2x1
jax: 0.10.0
libtpu: 0.0.40
codegen_flags: <defaults>
</compile_context>

<pallas_src>
import jax
import jax.numpy as jnp
from jax.experimental import pallas as pl
from jax.experimental.pallas import tpu as pltpu

STATE_DIM = 4      # CartPole-v1 observation dim
ACTION_DIM = 2     # CartPole-v1 action count
HIDDEN = 128
OUT_PAD = 8        # padded output width (kernel writes 8 cols; wrapper slices [:, :2])


def _cdiv(a, b):
    return -(-a // b)


def _round_up(x, m):
    return _cdiv(x, m) * m


def _choose_tiling(batch, max_tile_b, min_grid_steps):
    """Pick (tile_b, n_steps) so padding waste is <8 rows and v7x gets >=2 parallel steps."""
    batch8 = _round_up(batch, 8)
    max_steps = batch8 // 8                       # tile_b must stay >= 8
    n_steps = min(max(min_grid_steps, _cdiv(batch8, max_tile_b)), max_steps)
    tile_b = _round_up(_cdiv(batch8, n_steps), 8)
    n_steps = _cdiv(batch8, tile_b)
    return tile_b, n_steps


# ----------------------------------------------------------------------------- kernel
def _qnet_kernel(x_ref, w1_ref, w2_ref, w3_ref, b12_ref, b3_ref, o_ref):
    # x_ref:   (TILE_B, 4)    f32   -- raw state tile
    # w1_ref:  (4, 128)       bf16
    # w2_ref:  (128, 128)     bf16
    # w3_ref:  (128, 8)       bf16  -- columns 0..1 = W3, rest 0
    # b12_ref: (2, 128)       f32   -- row 0 = b1, row 1 = b2
    # b3_ref:  (1, 8)         f32   -- cols 0..1 = b3, rest 0
    # o_ref:   (TILE_B, 8)    f32   -- padded Q-values
    x = x_ref[...].astype(jnp.bfloat16)

    # Layer 1: bf16 MXU matmul, f32 bias-add + ReLU epilogue.
    h1 = jnp.dot(x, w1_ref[...], preferred_element_type=jnp.float32)
    h1 = jnp.maximum(h1 + b12_ref[0:1, :], 0.0)

    # Layer 2.
    h2 = jnp.dot(h1.astype(jnp.bfloat16), w2_ref[...],
                 preferred_element_type=jnp.float32)
    h2 = jnp.maximum(h2 + b12_ref[1:2, :], 0.0)

    # Layer 3 into the narrow 8-wide padded output (padded weight/bias columns are exactly 0).
    out = jnp.dot(h2.astype(jnp.bfloat16), w3_ref[...],
                  preferred_element_type=jnp.float32)
    o_ref[...] = (out + b3_ref[...]).astype(o_ref.dtype)


# ----------------------------------------------------------------------------- wrapper
def qnetwork_forward(state, packed_params, *, max_tile_b=1024, min_grid_steps=2):
    """state: (B, STATE_DIM) float32. Returns Q-values (B, ACTION_DIM) float32."""
    w1, w2, w3_pad, b12, b3_pad = packed_params
    batch = state.shape[0]

    tile_b, n_steps = _choose_tiling(batch, max_tile_b, min_grid_steps)
    padded_b = tile_b * n_steps

    # Single pad on the batch axis only (no width padding, no constant-1 column).
    x = state if padded_b == batch else jnp.pad(state, ((0, padded_b - batch), (0, 0)))

    resident = lambda i: (0, 0)   # params: same block every step -> stay resident in VMEM
    q_pad = pl.pallas_call(
        _qnet_kernel,
        out_shape=jax.ShapeDtypeStruct((padded_b, OUT_PAD), jnp.float32),
        grid_spec=pltpu.PrefetchScalarGridSpec(
            num_scalar_prefetch=0,
            grid=(n_steps,),
            in_specs=[
                pl.BlockSpec((tile_b, STATE_DIM), lambda i: (i, 0)),    # x tile
                pl.BlockSpec((STATE_DIM, HIDDEN), resident),            # W1
                pl.BlockSpec((HIDDEN, HIDDEN), resident),               # W2
                pl.BlockSpec((HIDDEN, OUT_PAD), resident),              # W3 (padded cols)
                pl.BlockSpec((2, HIDDEN), resident),                    # b1 / b2 pack
                pl.BlockSpec((1, OUT_PAD), resident),                   # b3 (padded cols)
            ],
            out_specs=pl.BlockSpec((tile_b, OUT_PAD), lambda i: (i, 0)),
        ),
        compiler_params=pltpu.CompilerParams(
            dimension_semantics=("parallel",),
        ),
    )(x, w1, w2, w3_pad, b12, b3_pad)

    return q_pad[:batch, :ACTION_DIM]


# ----------------------------------------------------------------------------- params
def init_params(key):
    """PyTorch-default-like init: U(-1/sqrt(fan_in), 1/sqrt(fan_in)), stored as (in, out)."""
    def linear(k, fan_in, fan_out):
        kw, kb = jax.random.split(k)
        bound = 1.0 / jnp.sqrt(fan_in)
        w = jax.random.uniform(kw, (fan_in, fan_out), jnp.float32, -bound, bound)
        b = jax.random.uniform(kb, (fan_out,), jnp.float32, -bound, bound)
        return w, b

    k1, k2, k3 = jax.random.split(key, 3)
    w1, b1 = linear(k1, STATE_DIM, HIDDEN)
    w2, b2 = linear(k2, HIDDEN, HIDDEN)
    w3, b3 = linear(k3, HIDDEN, ACTION_DIM)
    return (w1, b1, w2, b2, w3, b3)


def pack_params(params):
    """Pack the 6 PyTorch-style tensors into 5 kernel arrays (bf16 weights, f32 biases)."""
    w1, b1, w2, b2, w3, b3 = params

    w3_pad = jnp.zeros((HIDDEN, OUT_PAD), jnp.float32)
    w3_pad = w3_pad.at[:, :ACTION_DIM].set(w3)         # padded columns stay exactly zero

    b12 = jnp.stack([b1, b2], axis=0)                  # (2, 128) f32

    b3_pad = jnp.zeros((1, OUT_PAD), jnp.float32)
    b3_pad = b3_pad.at[0, :ACTION_DIM].set(b3)         # padded bias columns stay exactly zero

    return (w1.astype(jnp.bfloat16),
            w2.astype(jnp.bfloat16),
            w3_pad.astype(jnp.bfloat16),
            b12,
            b3_pad)


# ----------------------------------------------------------------------------- references
def reference_forward_f32(state, params):
    """Pure-f32 reference matching the PyTorch module semantics."""
    w1, b1, w2, b2, w3, b3 = params
    h1 = jnp.maximum(state @ w1 + b1, 0.0)
    h2 = jnp.maximum(h1 @ w2 + b2, 0.0)
    return h2 @ w3 + b3


def reference_forward_packed(state, packed_params):
    """Plain-JAX reference mimicking the kernel's bf16-weight / f32-accumulate numerics."""
    w1, w2, w3_pad, b12, b3_pad = packed_params
    x = state.astype(jnp.bfloat16)
    h1 = jnp.maximum(jnp.dot(x, w1, preferred_element_type=jnp.float32) + b12[0:1, :], 0.0)
    h2 = jnp.dot(h1.astype(jnp.bfloat16), w2, preferred_element_type=jnp.float32)
    h2 = jnp.maximum(h2 + b12[1:2, :], 0.0)
    out = jnp.dot(h2.astype(jnp.bfloat16), w3_pad, preferred_element_type=jnp.float32)
    out = out + b3_pad
    return out[:, :ACTION_DIM]


# ----------------------------------------------------------------------------- main
if __name__ == "__main__":
    key = jax.random.PRNGKey(0)
    k_params, k_small, k_big = jax.random.split(key, 3)

    params = init_params(k_params)
    packed = pack_params(params)

    # Small batch (single-tile path).
    state_small = jax.random.normal(k_small, (8, STATE_DIM), jnp.float32)
    q_small = jax.block_until_ready(qnetwork_forward(state_small, packed))
    assert q_small.shape == (8, ACTION_DIM)
    ref_small = reference_forward_packed(state_small, packed)
    assert jnp.allclose(q_small, ref_small, atol=2e-3, rtol=2e-3)
    # Looser check vs. the pure-f32 PyTorch-equivalent (bf16 weight quantization tolerance).
    ref_f32 = reference_forward_f32(state_small, params)
    assert jnp.allclose(q_small, ref_f32, atol=5e-2, rtol=5e-2)

    # Odd, larger batch (exercises batch-axis padding and a multi-step parallel grid).
    state_big = jax.random.normal(k_big, (260, STATE_DIM), jnp.float32)
    q_big = jax.block_until_ready(qnetwork_forward(state_big, packed))
    assert q_big.shape == (260, ACTION_DIM)
    ref_big = reference_forward_packed(state_big, packed)
    assert jnp.allclose(q_big, ref_big, atol=2e-3, rtol=2e-3)

    print("KERNEL_OK")
</pallas_src>

<mosaic_0001>
module attributes {stable_mosaic.version = 11 : i64} {
  func.func @_qnet_kernel(%arg0: i32, %arg1: memref<8x4xf32, #tpu.memory_space<vmem>>, %arg2: memref<4x128xbf16, #tpu.memory_space<vmem>>, %arg3: memref<128x128xbf16, #tpu.memory_space<vmem>>, %arg4: memref<128x8xbf16, #tpu.memory_space<vmem>>, %arg5: memref<2x128xf32, #tpu.memory_space<vmem>>, %arg6: memref<1x8xf32, #tpu.memory_space<vmem>>, %arg7: memref<8x8xf32, #tpu.memory_space<vmem>>) attributes {dimension_semantics = [#tpu.dimension_semantics<parallel>], iteration_bounds = array<i64: 1>, scalar_prefetch = 0 : i64, scratch_operands = 0 : i64, tpu.core_type = #tpu.core_type<tc>, window_params = [{transform_indices = @transform_0, window_bounds = array<i64: 8, 4>}, {pipeline_mode = #tpu.pipeline_mode<synchronous>, transform_indices = @transform_1, window_bounds = array<i64: 4, 128>}, {pipeline_mode = #tpu.pipeline_mode<synchronous>, transform_indices = @transform_2, window_bounds = array<i64: 128, 128>}, {pipeline_mode = #tpu.pipeline_mode<synchronous>, transform_indices = @transform_3, window_bounds = array<i64: 128, 8>}, {pipeline_mode = #tpu.pipeline_mode<synchronous>, transform_indices = @transform_4, window_bounds = array<i64: 2, 128>}, {pipeline_mode = #tpu.pipeline_mode<synchronous>, transform_indices = @transform_5, window_bounds = array<i64: 1, 8>}, {transform_indices = @transform_6, window_bounds = array<i64: 8, 8>}]} {
    %c0 = arith.constant 0 : index
    %c0_0 = arith.constant 0 : index
    %0 = vector.load %arg1[%c0, %c0_0] : memref<8x4xf32, #tpu.memory_space<vmem>>, vector<8x4xf32>
    %1 = arith.truncf %0 : vector<8x4xf32> to vector<8x4xbf16>
    %c0_1 = arith.constant 0 : index
    %c0_2 = arith.constant 0 : index
    %2 = vector.load %arg2[%c0_1, %c0_2] : memref<4x128xbf16, #tpu.memory_space<vmem>>, vector<4x128xbf16>
    %cst = arith.constant dense<0.000000e+00> : vector<8x128xf32>
    %3 = tpu.matmul %1, %2, %cst {dimension_numbers = #tpu.dot_dimension_numbers<[1], [0], [0], [1], [0, 0, 1, 1], [], []>} : vector<8x4xbf16>, vector<4x128xbf16>, vector<8x128xf32> -> vector<8x128xf32>
    %c0_3 = arith.constant 0 : index
    %c0_4 = arith.constant 0 : index
    %4 = vector.load %arg5[%c0_3, %c0_4] : memref<2x128xf32, #tpu.memory_space<vmem>>, vector<1x128xf32>
    %5 = vector.broadcast %4 : vector<1x128xf32> to vector<8x128xf32>
    %6 = arith.addf %3, %5 : vector<8x128xf32>
    %cst_5 = arith.constant 0.000000e+00 : f32
    %7 = vector.broadcast %cst_5 : f32 to vector<8x128xf32>
    %8 = arith.maximumf %6, %7 : vector<8x128xf32>
    %9 = arith.truncf %8 : vector<8x128xf32> to vector<8x128xbf16>
    %c0_6 = arith.constant 0 : index
    %c0_7 = arith.constant 0 : index
    %10 = vector.load %arg3[%c0_6, %c0_7] : memref<128x128xbf16, #tpu.memory_space<vmem>>, vector<128x128xbf16>
    %cst_8 = arith.constant dense<0.000000e+00> : vector<8x128xf32>
    %11 = tpu.matmul %9, %10, %cst_8 {dimension_numbers = #tpu.dot_dimension_numbers<[1], [0], [0], [1], [0, 0, 1, 1], [], []>} : vector<8x128xbf16>, vector<128x128xbf16>, vector<8x128xf32> -> vector<8x128xf32>
    %c1 = arith.constant 1 : index
    %c0_9 = arith.constant 0 : index
    %12 = vector.load %arg5[%c1, %c0_9] : memref<2x128xf32, #tpu.memory_space<vmem>>, vector<1x128xf32>
    %13 = vector.broadcast %12 : vector<1x128xf32> to vector<8x128xf32>
    %14 = arith.addf %11, %13 : vector<8x128xf32>
    %cst_10 = arith.constant 0.000000e+00 : f32
    %15 = vector.broadcast %cst_10 : f32 to vector<8x128xf32>
    %16 = arith.maximumf %14, %15 : vector<8x128xf32>
    %17 = arith.truncf %16 : vector<8x128xf32> to vector<8x128xbf16>
    %c0_11 = arith.constant 0 : index
    %c0_12 = arith.constant 0 : index
    %18 = vector.load %arg4[%c0_11, %c0_12] : memref<128x8xbf16, #tpu.memory_space<vmem>>, vector<128x8xbf16>
    %cst_13 = arith.constant dense<0.000000e+00> : vector<8x8xf32>
    %19 = tpu.matmul %17, %18, %cst_13 {dimension_numbers = #tpu.dot_dimension_numbers<[1], [0], [0], [1], [0, 0, 1, 1], [], []>} : vector<8x128xbf16>, vector<128x8xbf16>, vector<8x8xf32> -> vector<8x8xf32>
    %c0_14 = arith.constant 0 : index
    %c0_15 = arith.constant 0 : index
    %20 = vector.load %arg6[%c0_14, %c0_15] : memref<1x8xf32, #tpu.memory_space<vmem>>, vector<1x8xf32>
    %21 = vector.broadcast %20 : vector<1x8xf32> to vector<8x8xf32>
    %22 = arith.addf %19, %21 : vector<8x8xf32>
    %c0_16 = arith.constant 0 : index
    %c0_17 = arith.constant 0 : index
    %23 = vector.load %arg7[%c0_16, %c0_17] : memref<8x8xf32, #tpu.memory_space<vmem>>, vector<8x8xf32>
    tpu.vector_store %arg7[%c0_16, %c0_17], %22 {strides = array<i32>} : memref<8x8xf32, #tpu.memory_space<vmem>>, vector<8x8xf32>,
    return
  }
  func.func @transform_0(%arg0: i32) -> (i32, i32) {
    %c0_i32 = arith.constant 0 : i32
    %c0_i32_0 = arith.constant 0 : i32
    return %arg0, %c0_i32 : i32, i32
  }
  func.func @transform_1(%arg0: i32) -> (i32, i32) {
    %c0_i32 = arith.constant 0 : i32
    %c0_i32_0 = arith.constant 0 : i32
    %c0_i32_1 = arith.constant 0 : i32
    return %c0_i32, %c0_i32_0 : i32, i32
  }
  func.func @transform_2(%arg0: i32) -> (i32, i32) {
    %c0_i32 = arith.constant 0 : i32
    %c0_i32_0 = arith.constant 0 : i32
    %c0_i32_1 = arith.constant 0 : i32
    return %c0_i32, %c0_i32_0 : i32, i32
  }
  func.func @transform_3(%arg0: i32) -> (i32, i32) {
    %c0_i32 = arith.constant 0 : i32
    %c0_i32_0 = arith.constant 0 : i32
    %c0_i32_1 = arith.constant 0 : i32
    return %c0_i32, %c0_i32_0 : i32, i32
  }
  func.func @transform_4(%arg0: i32) -> (i32, i32) {
    %c0_i32 = arith.constant 0 : i32
    %c0_i32_0 = arith.constant 0 : i32
    %c0_i32_1 = arith.constant 0 : i32
    return %c0_i32, %c0_i32_0 : i32, i32
  }
  func.func @transform_5(%arg0: i32) -> (i32, i32) {
    %c0_i32 = arith.constant 0 : i32
    %c0_i32_0 = arith.constant 0 : i32
    %c0_i32_1 = arith.constant 0 : i32
    return %c0_i32, %c0_i32_0 : i32, i32
  }
  func.func @transform_6(%arg0: i32) -> (i32, i32) {
    %c0_i32 = arith.constant 0 : i32
    %c0_i32_0 = arith.constant 0 : i32
    return %arg0, %c0_i32 : i32, i32
  }
}

</mosaic_0001>

<llo_original>
// kernel: tpu_custom_call.1
$region0: #{tpu_custom_call.1}
  #allocation0 [shape = 'u32[]', space=smem, size = 0x4, offset = 0x4, fixed_abs, tag = 'smem constant byte address 0x4 - core index']
  #allocation1 [shape = 'u32[144,128]{1,0:T(1,128)}', space=vmem, size = 0x12000, scoped, tag = 'internal scratch']
  %s0 = inlined_call_operand.vmem [shape: f32[8,4], index: 0, kind: input, shape index: {}]
  %s1 = inlined_call_operand.vmem [shape: bf16[4,128], index: 1, kind: input, shape index: {}]
  %s2 = inlined_call_operand.vmem [shape: bf16[128,128], index: 2, kind: input, shape index: {}]
  %s3 = inlined_call_operand.vmem [shape: bf16[128,8], index: 3, kind: input, shape index: {}]
  %s4 = inlined_call_operand.vmem [shape: f32[2,128], index: 4, kind: input, shape index: {}]
  %s5 = inlined_call_operand.vmem [shape: f32[1,8], index: 5, kind: input, shape index: {}]
  %s6 = inlined_call_operand.hbm [shape: f32[8,8], index: 6, kind: output, shape index: {}]
  %s7 = sld [smem:[#allocation0]]
  $region34: #{tpu_custom_call.1} parent=0
    _
  %s9 = ssub.s32 1, %s7
  %s10 = scalar_select 0, %s9, %s7
  $region1: #{tpu_custom_call.1} parent=0
    #allocation2 [shape = 'u8[4096]{0}', space=vmem, size = 0x1000, scoped, tag = 'output window, operand 0, single buffered']
    #allocation3 [shape = 's32[1]{0}', space=sflag, size = 0x4, scoped, tag = 'scoped memory for tpu_custom_call.1']
    %11 = vsyncpa [#allocation3], 0
    // Predicated region
    $region2: #{tpu_custom_call.1} parent=1 // pred_check
      _
    $region3: #{tpu_custom_call.1} parent=1 // pred_check_branch
      %13 = sbr.rel (0) target = $region5
    $region4: #{tpu_custom_call.1} parent=1 // pred_region
      _
    $region5: #{tpu_custom_call.1} parent=1 // pred_fallthru
      _
    // Predicated region
    $region6: #{tpu_custom_call.1} parent=1 // pred_check
      _
    $region7: #{tpu_custom_call.1} parent=1 // pred_check_branch
      %15 = sbr.rel (0) target = $region9
    $region8: #{tpu_custom_call.1} parent=1 // pred_region
      _
    $region9: #{tpu_custom_call.1} parent=1 // pred_fallthru
      _
    // Predicated region
    $region10: #{tpu_custom_call.1} parent=1 // pred_check
      _
    $region11: #{tpu_custom_call.1} parent=1 // pred_check_branch
      %17 = sbr.rel (0) target = $region13
    $region12: #{tpu_custom_call.1} parent=1 // pred_region
      _
    $region13: #{tpu_custom_call.1} parent=1 // pred_fallthru
      _
    // Predicated region
    $region14: #{tpu_custom_call.1} parent=1 // pred_check
      _
    $region15: #{tpu_custom_call.1} parent=1 // pred_check_branch
      %19 = sbr.rel (0) target = $region17
    $region16: #{tpu_custom_call.1} parent=1 // pred_region
      _
    $region17: #{tpu_custom_call.1} parent=1 // pred_fallthru
      _
    // Predicated region
    $region18: #{tpu_custom_call.1} parent=1 // pred_check
      _
    $region19: #{tpu_custom_call.1} parent=1 // pred_check_branch
      %21 = sbr.rel (0) target = $region21
    $region20: #{tpu_custom_call.1} parent=1 // pred_region
      _
    $region21: #{tpu_custom_call.1} parent=1 // pred_fallthru
      _
    // Predicated region
    $region22: #{tpu_custom_call.1} parent=1 // pred_check
      _
    $region23: #{tpu_custom_call.1} parent=1 // pred_check_branch
      %23 = sbr.rel (0) target = $region25
    $region24: #{tpu_custom_call.1} parent=1 // pred_region
      _
    $region25: #{tpu_custom_call.1} parent=1 // pred_fallthru
      _
    %v25 = vld [vmem:[%s0] sm:$0xff]
    %v26 = vpack.c.bf16 %v25, %v25
    %v27 = vld [vmem:[%s1] sm:$0x3]
    %v28 = vld [vmem:[%s4] sm:$0x1]
    %v29 = vlaneseq
    %v30 = vshrl.u32 %v29, 7
    %v31 = vsub.s32 0, %v30
    %v32 = vrot.slane %v28, %v31
    %vm33 = vcmask 31744
    %v35 = vsel %vm33, %v26, 0
    %vm37 = vcmask 1041408
    %v39 = vsel %vm37, %v27, 0
    %41 = vmatprep.subr.bf16.mxu0 0
    %42 = vmatpush1.bf16.msra.mxu0 %v39
    %43 = vmatprep.subr.bf16.mxu0 0
    %44 = vmatpush1.bf16.msra.mxu0 0
    %45 = vmatprep.subr.bf16.mxu0 0
    %46 = vmatpush1.bf16.msra.mxu0 0
    %47 = vmatprep.subr.bf16.mxu0 0
    %48 = vmatpush1.bf16.msra.mxu0 0
    %49 = vmatprep.subr.bf16.mxu0 0
    %50 = vmatpush1.bf16.msra.mxu0 0
    %51 = vmatprep.subr.bf16.mxu0 0
    %52 = vmatpush1.bf16.msra.mxu0 0
    %53 = vmatprep.subr.bf16.mxu0 0
    %54 = vmatpush1.bf16.msra.mxu0 0
    %55 = vmatprep.subr.bf16.mxu0 0
    %56 = vmatpush1.bf16.msra.mxu0 0
    %57 = vmatprep.subr.bf16.mxu0 0
    %58 = vmatpush1.bf16.msra.mxu0 0
    %59 = vmatprep.subr.bf16.mxu0 0
    %60 = vmatpush1.bf16.msra.mxu0 0
    %61 = vmatprep.subr.bf16.mxu0 0
    %62 = vmatpush1.bf16.msra.mxu0 0
    %63 = vmatprep.subr.bf16.mxu0 0
    %64 = vmatpush1.bf16.msra.mxu0 0
    %65 = vmatprep.subr.bf16.mxu0 0
    %66 = vmatpush1.bf16.msra.mxu0 0
    %67 = vmatprep.subr.bf16.mxu0 0
    %68 = vmatpush1.bf16.msra.mxu0 0
    %69 = vmatprep.subr.bf16.mxu0 0
    %70 = vmatpush1.bf16.msra.mxu0 0
    %71 = vmatprep.subr.bf16.mxu0 0
    %72 = vmatpush1.bf16.msra.mxu0 0
    %73 = vmatprep.mubr.bf16.mxu0 0
    %74 = vmatmul.mubr.bf16.gmra.mrb[0].mxu0 %v35
    %v75 = vpop.f32.mrb[0].mxu0
    %v76 = vadd.f32 %v32, %v75
    %v77 = vpop.f32.mrb[0].mxu0
    %v78 = vpop.f32.mrb[0].mxu0
    %v79 = vpop.f32.mrb[0].mxu0
    %80 = vdwg.mxu0
    %v81 = vmax.f32 %v76, 0.0
    %v82 = vpack.c.bf16 %v81, %v81
    %v83 = vld [vmem:[%s2] sm:$0xf]
    %v84 = vld [vmem:[%s2 + $0x4] sm:$0xf]
    %v85 = vld [vmem:[%s2 + $0x8] sm:$0xf]
    %v86 = vld [vmem:[%s2 + $0xc] sm:$0xf]
    %v87 = vld [vmem:[%s2 + $0x10] sm:$0xf]
    %v88 = vld [vmem:[%s2 + $0x14] sm:$0xf]
    %v89 = vld [vmem:[%s2 + $0x18] sm:$0xf]
    %v90 = vld [vmem:[%s2 + $0x1c] sm:$0xf]
    %v91 = vld [vmem:[%s2 + $0x20] sm:$0xf]
    %v92 = vld [vmem:[%s2 + $0x24] sm:$0xf]
    %v93 = vld [vmem:[%s2 + $0x28] sm:$0xf]
    %v94 = vld [vmem:[%s2 + $0x2c] sm:$0xf]
    %v95 = vld [vmem:[%s2 + $0x30] sm:$0xf]
    %v96 = vld [vmem:[%s2 + $0x34] sm:$0xf]
    %v97 = vld [vmem:[%s2 + $0x38] sm:$0xf]
    %v98 = vld [vmem:[%s2 + $0x3c] sm:$0xf]
    %v99 = vld [vmem:[%s4 + $0x1] sm:$0x1]
    %v100 = vlaneseq
    %v101 = vshrl.u32 %v100, 7
    %v102 = vsub.s32 0, %v101
    %v103 = vrot.slane %v99, %v102
    %v120 = vunpack.c.l.b16 %v83
    %v121 = vunpack.c.l.b16 %v84
    %v122 = vunpack.c.l.b16 %v85
    %v123 = vunpack.c.l.b16 %v86
    %v124 = vunpack.c.l.b16 %v87
    %v125 = vunpack.c.l.b16 %v88
    %v126 = vunpack.c.l.b16 %v89
    %v127 = vunpack.c.l.b16 %v90
    %v128 = vunpack.c.l.b16 %v91
    %v129 = vunpack.c.l.b16 %v92
    %v130 = vunpack.c.l.b16 %v93
    %v131 = vunpack.c.l.b16 %v94
    %v132 = vunpack.c.l.b16 %v95
    %v133 = vunpack.c.l.b16 %v96
    %v134 = vunpack.c.l.b16 %v97
    %v135 = vunpack.c.l.b16 %v98
    %v136 = vpack.c.b16 %v121, %v120
    %v137 = vpack.c.b16 %v123, %v122
    %v138 = vpack.c.b16 %v125, %v124
    %v139 = vpack.c.b16 %v127, %v126
    %v140 = vpack.c.b16 %v129, %v128
    %v141 = vpack.c.b16 %v131, %v130
    %v142 = vpack.c.b16 %v133, %v132
    %v143 = vpack.c.b16 %v135, %v134
    %152 = vmatprep.subr.bf16.mxu0 0
    %153 = vmatpush1.bf16.msra.mxu0 %v136
    %154 = vmatprep.subr.bf16.mxu0 0
    %155 = vmatpush1.bf16.msra.mxu0 %v137
    %156 = vmatprep.subr.bf16.mxu0 0
    %157 = vmatpush1.bf16.msra.mxu0 %v138
    %158 = vmatprep.subr.bf16.mxu0 0
    %159 = vmatpush1.bf16.msra.mxu0 %v139
    %160 = vmatprep.subr.bf16.mxu0 0
    %161 = vmatpush1.bf16.msra.mxu0 %v140
    %162 = vmatprep.subr.bf16.mxu0 0
    %163 = vmatpush1.bf16.msra.mxu0 %v141
    %164 = vmatprep.subr.bf16.mxu0 0
    %165 = vmatpush1.bf16.msra.mxu0 %v142
    %166 = vmatprep.subr.bf16.mxu0 0
    %167 = vmatpush1.bf16.msra.mxu0 %v143
    %168 = vmatprep.subr.bf16.mxu0 0
    %169 = vmatpush1.bf16.msra.mxu0 0
    %170 = vmatprep.subr.bf16.mxu0 0
    %171 = vmatpush1.bf16.msra.mxu0 0
    %172 = vmatprep.subr.bf16.mxu0 0
    %173 = vmatpush1.bf16.msra.mxu0 0
    %174 = vmatprep.subr.bf16.mxu0 0
    %175 = vmatpush1.bf16.msra.mxu0 0
    %176 = vmatprep.subr.bf16.mxu0 0
    %177 = vmatpush1.bf16.msra.mxu0 0
    %178 = vmatprep.subr.bf16.mxu0 0
    %179 = vmatpush1.bf16.msra.mxu0 0
    %180 = vmatprep.subr.bf16.mxu0 0
    %181 = vmatpush1.bf16.msra.mxu0 0
    %182 = vmatprep.subr.bf16.mxu0 0
    %183 = vmatpush1.bf16.msra.mxu0 0
    %184 = vmatprep.mubr.bf16.mxu0 0
    %185 = vmatmul.mubr.bf16.gmra.mrb[0].mxu0 %v82
    %v186 = vpop.f32.mrb[0].mxu0
    %v187 = vadd.f32 %v103, %v186
    %v188 = vpop.f32.mrb[0].mxu0
    %v189 = vpop.f32.mrb[0].mxu0
    %v190 = vpop.f32.mrb[0].mxu0
    %191 = vdwg.mxu0
    %v192 = vmax.f32 %v187, 0.0
    %v193 = vpack.c.bf16 %v192, %v192
    %v194 = vld [vmem:[%s3] sm:$0xf]
    %v195 = vld [vmem:[%s3 + $0x4] sm:$0xf]
    %v196 = vld [vmem:[%s3 + $0x8] sm:$0xf]
    %v197 = vld [vmem:[%s3 + $0xc] sm:$0xf]
    %v198 = vld [vmem:[%s3 + $0x10] sm:$0xf]
    %v199 = vld [vmem:[%s3 + $0x14] sm:$0xf]
    %v200 = vld [vmem:[%s3 + $0x18] sm:$0xf]
    %v201 = vld [vmem:[%s3 + $0x1c] sm:$0xf]
    %v202 = vld [vmem:[%s3 + $0x20] sm:$0xf]
    %v203 = vld [vmem:[%s3 + $0x24] sm:$0xf]
    %v204 = vld [vmem:[%s3 + $0x28] sm:$0xf]
    %v205 = vld [vmem:[%s3 + $0x2c] sm:$0xf]
    %v206 = vld [vmem:[%s3 + $0x30] sm:$0xf]
    %v207 = vld [vmem:[%s3 + $0x34] sm:$0xf]
    %v208 = vld [vmem:[%s3 + $0x38] sm:$0xf]
    %v209 = vld [vmem:[%s3 + $0x3c] sm:$0xf]
    %v210 = vld [vmem:[%s5] sm:$0x1]
    %v212 = vlaneseq
    %v213 = vshrl.u32 %v212, 7
    %v214 = vsub.s32 0, %v213
    %v215 = vrot.slane %v210, %v214
    %v233 = vunpack.c.l.b16 %v194
    %v234 = vunpack.c.l.b16 %v195
    %v235 = vunpack.c.l.b16 %v196
    %v236 = vunpack.c.l.b16 %v197
    %v237 = vunpack.c.l.b16 %v198
    %v238 = vunpack.c.l.b16 %v199
    %v239 = vunpack.c.l.b16 %v200
    %v240 = vunpack.c.l.b16 %v201
    %v241 = vunpack.c.l.b16 %v202
    %v242 = vunpack.c.l.b16 %v203
    %v243 = vunpack.c.l.b16 %v204
    %v244 = vunpack.c.l.b16 %v205
    %v245 = vunpack.c.l.b16 %v206
    %v246 = vunpack.c.l.b16 %v207
    %v247 = vunpack.c.l.b16 %v208
    %v248 = vunpack.c.l.b16 %v209
    %v249 = vpack.c.b16 %v234, %v233
    %v250 = vpack.c.b16 %v236, %v235
    %v251 = vpack.c.b16 %v238, %v237
    %v252 = vpack.c.b16 %v240, %v239
    %v253 = vpack.c.b16 %v242, %v241
    %v254 = vpack.c.b16 %v244, %v243
    %v255 = vpack.c.b16 %v246, %v245
    %v256 = vpack.c.b16 %v248, %v247
    %265 = vmatprep.subr.bf16.mxu0 0
    %266 = vmatpush1.bf16.msra.mxu0 %v249
    %267 = vmatprep.subr.bf16.mxu0 0
    %268 = vmatpush1.bf16.msra.mxu0 %v250
    %269 = vmatprep.subr.bf16.mxu0 0
    %270 = vmatpush1.bf16.msra.mxu0 %v251
    %271 = vmatprep.subr.bf16.mxu0 0
    %272 = vmatpush1.bf16.msra.mxu0 %v252
    %273 = vmatprep.subr.bf16.mxu0 0
    %274 = vmatpush1.bf16.msra.mxu0 %v253
    %275 = vmatprep.subr.bf16.mxu0 0
    %276 = vmatpush1.bf16.msra.mxu0 %v254
    %277 = vmatprep.subr.bf16.mxu0 0
    %278 = vmatpush1.bf16.msra.mxu0 %v255
    %279 = vmatprep.subr.bf16.mxu0 0
    %280 = vmatpush1.bf16.msra.mxu0 %v256
    %281 = vmatprep.subr.bf16.mxu0 0
    %282 = vmatpush1.bf16.msra.mxu0 0
    %283 = vmatprep.subr.bf16.mxu0 0
    %284 = vmatpush1.bf16.msra.mxu0 0
    %285 = vmatprep.subr.bf16.mxu0 0
    %286 = vmatpush1.bf16.msra.mxu0 0
    %287 = vmatprep.subr.bf16.mxu0 0
    %288 = vmatpush1.bf16.msra.mxu0 0
    %289 = vmatprep.subr.bf16.mxu0 0
    %290 = vmatpush1.bf16.msra.mxu0 0
    %291 = vmatprep.subr.bf16.mxu0 0
    %292 = vmatpush1.bf16.msra.mxu0 0
    %293 = vmatprep.subr.bf16.mxu0 0
    %294 = vmatpush1.bf16.msra.mxu0 0
    %295 = vmatprep.subr.bf16.mxu0 0
    %296 = vmatpush1.bf16.msra.mxu0 0
    %297 = vmatprep.mubr.bf16.mxu0 0
    %298 = vmatmul.mubr.bf16.gmra.mrb[0].mxu0 %v193
    %v299 = vpop.f32.mrb[0].mxu0
    %v300 = vadd.f32 %v215, %v299
    %v301 = vpop.f32.mrb[0].mxu0
    %v302 = vpop.f32.mrb[0].mxu0
    %v303 = vpop.f32.mrb[0].mxu0
    %304 = vdwg.mxu0
    %vm305 = vcmask 64512
    %306 = vst.msk [vmem:[#allocation2] sm:$0xff] %vm305, %v300
    // Predicated region
    $region26: #{tpu_custom_call.1} parent=1 // pred_check
      _
    $region27: #{tpu_custom_call.1} parent=1 // pred_check_branch
      %308 = sbr.rel (0) target = $region29
    $region28: #{tpu_custom_call.1} parent=1 // pred_region
      %s310 = ssub.s32 128, 128
      %311 = vsyncadd [#allocation3], %s310
      %s313 = sshll.u32 [#allocation2], 4
      %s314 = int_to_ptr.vmem [resolvable:$true] %s313
      %316 = dma.vmem_to_hbm [thread:$0]  %s314, 128, %s6, [#allocation3]
    $region29: #{tpu_custom_call.1} parent=1 // pred_fallthru
      _
    // Predicated region
    $region30: #{tpu_custom_call.1} parent=1 // pred_check
      _
    $region31: #{tpu_custom_call.1} parent=1 // pred_check_branch
      %318 = sbr.rel (0) target = $region33
    $region32: #{tpu_custom_call.1} parent=1 // pred_region
      %319 = dma.done [#allocation3], 128
    $region33: #{tpu_custom_call.1} parent=1 // pred_fallthru
      _
    %320 = vsyncpa [#allocation3], 1

</llo_original>
